<compile_context>
chip_gen: v6e
topology: v6e:2x2x1
jax: 0.10.0
libtpu: 0.0.40
codegen_flags: <defaults>
</compile_context>

<pallas_src>
import functools

import jax
import jax.numpy as jnp
from jax.experimental import pallas as pl
from jax.experimental.pallas import tpu as pltpu

_LANE = 128
_SUBLANE = 8


def _round_up(x, m):
    return ((x + m - 1) // m) * m


def mlp_kernel(x_ref, w1_ref, b1_ref, w2_ref, b2_ref, o_ref):
    # layer1: Linear(In -> H) on the MXU, f32 accumulation.
    h = jnp.dot(x_ref[...], w1_ref[...], preferred_element_type=jnp.float32)
    h = h + b1_ref[...]          # (1, H_pad) broadcasts over the batch tile
    # relu1 (VPU)
    h = jnp.maximum(h, 0.0)
    # layer2: Linear(H -> Out) on the MXU.
    y = jnp.dot(h, w2_ref[...], preferred_element_type=jnp.float32)
    y = y + b2_ref[...]          # (1, Out_pad) broadcasts
    # output: Sigmoid (exp/recip go to the EUP slot)
    o_ref[...] = jax.nn.sigmoid(y).astype(o_ref.dtype)


@functools.partial(jax.jit, static_argnames=("block_b",))
def mlp_forward(x, w1, b1, w2, b2, *, block_b=256):
    """x: (B, In) f32; w1: (In, H); b1: (H,); w2: (H, Out); b2: (Out,).

    Note: PyTorch nn.Linear stores weight as (out, in); weights here are the
    transposed (in, out) layout so the kernel computes y = x @ W + b directly.
    """
    B, In = x.shape
    H = w1.shape[1]
    Out = w2.shape[1]
    f32 = jnp.float32

    # Lane-dense padding (last dims up to a multiple of 128). Zero padding is
    # exact for the matmuls; padded output columns are sliced off below.
    In_p = _round_up(In, _LANE)
    H_p = _round_up(H, _LANE)
    Out_p = _round_up(Out, _LANE)

    # Batch tile: multiple of 8 sublanes, at most block_b; pad batch so the
    # grid divides evenly. Padded (zero) rows produce values sliced off below.
    TB = min(block_b, _round_up(B, _SUBLANE))
    B_p = _round_up(B, TB)

    x_p = jnp.pad(x.astype(f32), ((0, B_p - B), (0, In_p - In)))
    w1_p = jnp.pad(w1.astype(f32), ((0, In_p - In), (0, H_p - H)))
    b1_p = jnp.pad(b1.astype(f32), (0, H_p - H)).reshape(1, H_p)
    w2_p = jnp.pad(w2.astype(f32), ((0, H_p - H), (0, Out_p - Out)))
    b2_p = jnp.pad(b2.astype(f32), (0, Out_p - Out)).reshape(1, Out_p)

    # Explicit VMEM budget (bytes, f32): x/out tiles double-buffered by the
    # auto-pipeline, weights/biases resident. Clamped under v7x's 64 MiB.
    footprint = 4 * (
        2 * TB * In_p            # x tile, double-buffered
        + In_p * H_p + H_p       # w1 + b1 (resident)
        + H_p * Out_p + Out_p    # w2 + b2 (resident)
        + 2 * TB * Out_p         # out tile, double-buffered
    )
    vmem_limit = int(min(max(2 * footprint, 16 * 1024 * 1024), 60 * 1024 * 1024))

    grid = (B_p // TB,)
    cost = pl.CostEstimate(
        flops=2 * B_p * In_p * H_p + 2 * B_p * H_p * Out_p,
        transcendentals=B_p * Out_p,
        bytes_accessed=4 * (B_p * In_p + In_p * H_p + H_p * Out_p
                            + H_p + Out_p + B_p * Out_p),
    )

    out_p = pl.pallas_call(
        mlp_kernel,
        out_shape=jax.ShapeDtypeStruct((B_p, Out_p), f32),
        grid_spec=pltpu.PrefetchScalarGridSpec(
            num_scalar_prefetch=0,
            grid=grid,
            in_specs=[
                pl.BlockSpec((TB, In_p), lambda i: (i, 0)),    # batch-tiled x
                pl.BlockSpec((In_p, H_p), lambda i: (0, 0)),   # resident w1
                pl.BlockSpec((1, H_p), lambda i: (0, 0)),      # resident b1
                pl.BlockSpec((H_p, Out_p), lambda i: (0, 0)),  # resident w2
                pl.BlockSpec((1, Out_p), lambda i: (0, 0)),    # resident b2
            ],
            out_specs=pl.BlockSpec((TB, Out_p), lambda i: (i, 0)),
        ),
        compiler_params=pltpu.CompilerParams(
            dimension_semantics=("parallel",),  # shard batch tiles across TCs (v7x)
            vmem_limit_bytes=vmem_limit,
        ),
        cost_estimate=cost,
    )(x_p, w1_p, b1_p, w2_p, b2_p)
    return out_p[:B, :Out]


if __name__ == "__main__":
    # Shapes implied by the module: Linear(input->hidden) + Linear(hidden->output).
    # Batch of 256 with 128-row tiles exercises the pipelined 2-step grid.
    batch, input_size, hidden_size, output_size = 256, 32, 64, 16

    key = jax.random.PRNGKey(0)
    kx, kw1, kb1, kw2, kb2 = jax.random.split(key, 5)

    x = jax.random.normal(kx, (batch, input_size), dtype=jnp.float32)

    # Deterministic param init (mimics PyTorch's uniform(-1/sqrt(fan_in), 1/sqrt(fan_in)))
    bound1 = 1.0 / jnp.sqrt(jnp.float32(input_size))
    bound2 = 1.0 / jnp.sqrt(jnp.float32(hidden_size))
    w1 = jax.random.uniform(kw1, (input_size, hidden_size), jnp.float32, -bound1, bound1)
    b1 = jax.random.uniform(kb1, (hidden_size,), jnp.float32, -bound1, bound1)
    w2 = jax.random.uniform(kw2, (hidden_size, output_size), jnp.float32, -bound2, bound2)
    b2 = jax.random.uniform(kb2, (output_size,), jnp.float32, -bound2, bound2)

    out = mlp_forward(x, w1, b1, w2, b2, block_b=128)
    out = jax.block_until_ready(out)

    # Cross-check against a pure-JAX reference of the PyTorch forward pass.
    ref = jax.nn.sigmoid(jnp.maximum(x @ w1 + b1, 0.0) @ w2 + b2)
    assert out.shape == (batch, output_size)
    assert jnp.allclose(out, ref, atol=1e-5, rtol=1e-5)

    print("KERNEL_OK")
</pallas_src>

<mosaic_0001>
module attributes {stable_mosaic.version = 11 : i64} {
  func.func @mlp_kernel(%arg0: i32, %arg1: memref<128x128xf32, #tpu.memory_space<vmem>>, %arg2: memref<128x128xf32, #tpu.memory_space<vmem>>, %arg3: memref<1x128xf32, #tpu.memory_space<vmem>>, %arg4: memref<128x128xf32, #tpu.memory_space<vmem>>, %arg5: memref<1x128xf32, #tpu.memory_space<vmem>>, %arg6: memref<128x128xf32, #tpu.memory_space<vmem>>) attributes {dimension_semantics = [#tpu.dimension_semantics<parallel>], iteration_bounds = array<i64: 2>, scalar_prefetch = 0 : i64, scratch_operands = 0 : i64, tpu.core_type = #tpu.core_type<tc>, window_params = [{transform_indices = @transform_0, window_bounds = array<i64: 128, 128>}, {pipeline_mode = #tpu.pipeline_mode<synchronous>, transform_indices = @transform_1, window_bounds = array<i64: 128, 128>}, {pipeline_mode = #tpu.pipeline_mode<synchronous>, transform_indices = @transform_2, window_bounds = array<i64: 1, 128>}, {pipeline_mode = #tpu.pipeline_mode<synchronous>, transform_indices = @transform_3, window_bounds = array<i64: 128, 128>}, {pipeline_mode = #tpu.pipeline_mode<synchronous>, transform_indices = @transform_4, window_bounds = array<i64: 1, 128>}, {transform_indices = @transform_5, window_bounds = array<i64: 128, 128>}]} {
    %c0 = arith.constant 0 : index
    %c0_0 = arith.constant 0 : index
    %0 = vector.load %arg1[%c0, %c0_0] : memref<128x128xf32, #tpu.memory_space<vmem>>, vector<128x128xf32>
    %c0_1 = arith.constant 0 : index
    %c0_2 = arith.constant 0 : index
    %1 = vector.load %arg2[%c0_1, %c0_2] : memref<128x128xf32, #tpu.memory_space<vmem>>, vector<128x128xf32>
    %cst = arith.constant dense<0.000000e+00> : vector<128x128xf32>
    %2 = tpu.matmul %0, %1, %cst {dimension_numbers = #tpu.dot_dimension_numbers<[1], [0], [0], [1], [0, 0, 1, 1], [], []>} : vector<128x128xf32>, vector<128x128xf32>, vector<128x128xf32> -> vector<128x128xf32>
    %c0_3 = arith.constant 0 : index
    %c0_4 = arith.constant 0 : index
    %3 = vector.load %arg3[%c0_3, %c0_4] : memref<1x128xf32, #tpu.memory_space<vmem>>, vector<1x128xf32>
    %4 = vector.broadcast %3 : vector<1x128xf32> to vector<128x128xf32>
    %5 = arith.addf %2, %4 : vector<128x128xf32>
    %cst_5 = arith.constant 0.000000e+00 : f32
    %6 = vector.broadcast %cst_5 : f32 to vector<128x128xf32>
    %7 = arith.maximumf %5, %6 : vector<128x128xf32>
    %c0_6 = arith.constant 0 : index
    %c0_7 = arith.constant 0 : index
    %8 = vector.load %arg4[%c0_6, %c0_7] : memref<128x128xf32, #tpu.memory_space<vmem>>, vector<128x128xf32>
    %cst_8 = arith.constant dense<0.000000e+00> : vector<128x128xf32>
    %9 = tpu.matmul %7, %8, %cst_8 {dimension_numbers = #tpu.dot_dimension_numbers<[1], [0], [0], [1], [0, 0, 1, 1], [], []>} : vector<128x128xf32>, vector<128x128xf32>, vector<128x128xf32> -> vector<128x128xf32>
    %c0_9 = arith.constant 0 : index
    %c0_10 = arith.constant 0 : index
    %10 = vector.load %arg5[%c0_9, %c0_10] : memref<1x128xf32, #tpu.memory_space<vmem>>, vector<1x128xf32>
    %11 = vector.broadcast %10 : vector<1x128xf32> to vector<128x128xf32>
    %12 = arith.addf %9, %11 : vector<128x128xf32>
    %13 = arith.negf %12 : vector<128x128xf32>
    %14 = math.exp %13 : vector<128x128xf32>
    %cst_11 = arith.constant 1.000000e+00 : f32
    %15 = vector.broadcast %cst_11 : f32 to vector<128x128xf32>
    %16 = arith.addf %15, %14 : vector<128x128xf32>
    %17 = arith.divf %15, %16 : vector<128x128xf32>
    %c0_12 = arith.constant 0 : index
    %c0_13 = arith.constant 0 : index
    %18 = vector.load %arg6[%c0_12, %c0_13] : memref<128x128xf32, #tpu.memory_space<vmem>>, vector<128x128xf32>
    tpu.vector_store %arg6[%c0_12, %c0_13], %17 {strides = array<i32>} : memref<128x128xf32, #tpu.memory_space<vmem>>, vector<128x128xf32>,
    return
  }
  func.func @transform_0(%arg0: i32) -> (i32, i32) {
    %c0_i32 = arith.constant 0 : i32
    %c0_i32_0 = arith.constant 0 : i32
    return %arg0, %c0_i32 : i32, i32
  }
  func.func @transform_1(%arg0: i32) -> (i32, i32) {
    %c0_i32 = arith.constant 0 : i32
    %c0_i32_0 = arith.constant 0 : i32
    %c0_i32_1 = arith.constant 0 : i32
    return %c0_i32, %c0_i32_0 : i32, i32
  }
  func.func @transform_2(%arg0: i32) -> (i32, i32) {
    %c0_i32 = arith.constant 0 : i32
    %c0_i32_0 = arith.constant 0 : i32
    %c0_i32_1 = arith.constant 0 : i32
    return %c0_i32, %c0_i32_0 : i32, i32
  }
  func.func @transform_3(%arg0: i32) -> (i32, i32) {
    %c0_i32 = arith.constant 0 : i32
    %c0_i32_0 = arith.constant 0 : i32
    %c0_i32_1 = arith.constant 0 : i32
    return %c0_i32, %c0_i32_0 : i32, i32
  }
  func.func @transform_4(%arg0: i32) -> (i32, i32) {
    %c0_i32 = arith.constant 0 : i32
    %c0_i32_0 = arith.constant 0 : i32
    %c0_i32_1 = arith.constant 0 : i32
    return %c0_i32, %c0_i32_0 : i32, i32
  }
  func.func @transform_5(%arg0: i32) -> (i32, i32) {
    %c0_i32 = arith.constant 0 : i32
    %c0_i32_0 = arith.constant 0 : i32
    return %arg0, %c0_i32 : i32, i32
  }
}

</mosaic_0001>

<llo_original>
// kernel: mlp_forward.1
$region0: #{mlp_forward.1}
  #allocation0 [shape = 'u32[]', space=smem, size = 0x4, offset = 0x4, fixed_abs, tag = 'smem constant byte address 0x4 - core index']
  #allocation1 [shape = 'u32[144,128]{1,0:T(1,128)}', space=vmem, size = 0x12000, scoped, tag = 'internal scratch']
  %s0 = inlined_call_operand.vmem [shape: f32[256,128], index: 0, kind: input, shape index: {}]
  %s1 = inlined_call_operand.vmem [shape: f32[128,128], index: 1, kind: input, shape index: {}]
  %s2 = inlined_call_operand.vmem [shape: f32[1,128], index: 2, kind: input, shape index: {}]
  %s3 = inlined_call_operand.vmem [shape: f32[128,128], index: 3, kind: input, shape index: {}]
  %s4 = inlined_call_operand.vmem [shape: f32[1,128], index: 4, kind: input, shape index: {}]
  %s5 = inlined_call_operand.vmem [shape: f32[256,128], index: 5, kind: output, shape index: {}]
  %s6 = sld [smem:[#allocation0]]
  $region53: #{mlp_forward.1} parent=0
    _
  %s8 = ssub.s32 1, %s6
  %s9 = scalar_select 0, %s8, %s6
  loop: start=0, step=1, limit=4
  $region2: #{mlp_forward.1} parent=0 // loop_pre_header
    _
  $region3: #{mlp_forward.1} parent=0 // loop_header
    %s11 = sphi 0, %s15
    %p12 = scmp.ge.s32.totalorder %s11, 4
    %s21 = sphi 0, %s23
    %s24 = sphi 0, %s21
    %s25 = sphi 0, %s24
    %s41 = sphi 0, %s25
    %s45 = sphi 0, %s45
    %s47 = sphi 0, %s45
    %s48 = sphi 0, %s47
    %s62 = sphi 0, %s48
    %s66 = sphi 0, %s66
    %s68 = sphi 0, %s66
    %s69 = sphi 0, %s68
    %s83 = sphi 0, %s69
    %s87 = sphi 0, %s87
    %s89 = sphi 0, %s87
    %s90 = sphi 0, %s89
    %s104 = sphi 0, %s90
    %s108 = sphi 0, %s108
    %s110 = sphi 0, %s108
    %s111 = sphi 0, %s110
    %s125 = sphi 0, %s111
    %s131 = sphi 0, %s133
    %s134 = sphi 0, %s131
    %s135 = sphi 0, %s134
    %s151 = sphi 0, %s135
  $region4: #{mlp_forward.1} parent=0 // loop_header_branch
    %14 = sbr.rel (%p12) target = $region8
  $region5: #{mlp_forward.1} parent=0 // loop_body
    %s16 = ssub.s32 %s11, 1
    %s17 = ssub.s32 %s11, 2
    %s18 = sadd.s32 %s11, 1
    %s19 = ssub.s32 %s11, %s18
    %p20 = scmp.eq.s32.totalorder %s19, 0
    %s22 = sadd.s32 %s21, 1
    %s23 = scalar_select %p20, %s21, %s22
    %p26 = pneg %p20
    %p27 = scmp.eq.s32.totalorder %s11, 1
    %p28 = por %p26, %p27
    %p29 = scmp.ne.s32.totalorder %s21, %s24
    %p30 = scmp.eq.s32.totalorder %s11, 0
    %p31 = por %p29, %p30
    %p32 = scmp.ne.s32.totalorder %s21, %s24
    %p33 = scmp.eq.s32.totalorder %s16, 1
    %p34 = por %p32, %p33
    %p35 = scmp.ne.s32.totalorder %s24, %s25
    %p36 = scmp.eq.s32.totalorder %s16, 0
    %p37 = por %p35, %p36
    %p38 = scmp.ne.s32.totalorder %s24, %s25
    %p39 = scmp.eq.s32.totalorder %s17, 1
    %p40 = por %p38, %p39
    %p42 = scmp.ne.s32.totalorder %s25, %s41
    %p43 = scmp.eq.s32.totalorder %s17, 0
    %p44 = por %p42, %p43
    %s46 = sadd.s32 %s45, 1
    %p49 = scmp.eq.s32.totalorder %s11, 1
    %p50 = scmp.ne.s32.totalorder %s45, %s47
    %p51 = scmp.eq.s32.totalorder %s11, 0
    %p52 = por %p50, %p51
    %p53 = scmp.ne.s32.totalorder %s45, %s47
    %p54 = scmp.eq.s32.totalorder %s16, 1
    %p55 = por %p53, %p54
    %p56 = scmp.ne.s32.totalorder %s47, %s48
    %p57 = scmp.eq.s32.totalorder %s16, 0
    %p58 = por %p56, %p57
    %p59 = scmp.ne.s32.totalorder %s47, %s48
    %p60 = scmp.eq.s32.totalorder %s17, 1
    %p61 = por %p59, %p60
    %p63 = scmp.ne.s32.totalorder %s48, %s62
    %p64 = scmp.eq.s32.totalorder %s17, 0
    %p65 = por %p63, %p64
    %s67 = sadd.s32 %s66, 1
    %p70 = scmp.eq.s32.totalorder %s11, 1
    %p71 = scmp.ne.s32.totalorder %s66, %s68
    %p72 = scmp.eq.s32.totalorder %s11, 0
    %p73 = por %p71, %p72
    %p74 = scmp.ne.s32.totalorder %s66, %s68
    %p75 = scmp.eq.s32.totalorder %s16, 1
    %p76 = por %p74, %p75
    %p77 = scmp.ne.s32.totalorder %s68, %s69
    %p78 = scmp.eq.s32.totalorder %s16, 0
    %p79 = por %p77, %p78
    %p80 = scmp.ne.s32.totalorder %s68, %s69
    %p81 = scmp.eq.s32.totalorder %s17, 1
    %p82 = por %p80, %p81
    %p84 = scmp.ne.s32.totalorder %s69, %s83
    %p85 = scmp.eq.s32.totalorder %s17, 0
    %p86 = por %p84, %p85
    %s88 = sadd.s32 %s87, 1
    %p91 = scmp.eq.s32.totalorder %s11, 1
    %p92 = scmp.ne.s32.totalorder %s87, %s89
    %p93 = scmp.eq.s32.totalorder %s11, 0
    %p94 = por %p92, %p93
    %p95 = scmp.ne.s32.totalorder %s87, %s89
    %p96 = scmp.eq.s32.totalorder %s16, 1
    %p97 = por %p95, %p96
    %p98 = scmp.ne.s32.totalorder %s89, %s90
    %p99 = scmp.eq.s32.totalorder %s16, 0
    %p100 = por %p98, %p99
    %p101 = scmp.ne.s32.totalorder %s89, %s90
    %p102 = scmp.eq.s32.totalorder %s17, 1
    %p103 = por %p101, %p102
    %p105 = scmp.ne.s32.totalorder %s90, %s104
    %p106 = scmp.eq.s32.totalorder %s17, 0
    %p107 = por %p105, %p106
    %s109 = sadd.s32 %s108, 1
    %p112 = scmp.eq.s32.totalorder %s11, 1
    %p113 = scmp.ne.s32.totalorder %s108, %s110
    %p114 = scmp.eq.s32.totalorder %s11, 0
    %p115 = por %p113, %p114
    %p116 = scmp.ne.s32.totalorder %s108, %s110
    %p117 = scmp.eq.s32.totalorder %s16, 1
    %p118 = por %p116, %p117
    %p119 = scmp.ne.s32.totalorder %s110, %s111
    %p120 = scmp.eq.s32.totalorder %s16, 0
    %p121 = por %p119, %p120
    %p122 = scmp.ne.s32.totalorder %s110, %s111
    %p123 = scmp.eq.s32.totalorder %s17, 1
    %p124 = por %p122, %p123
    %p126 = scmp.ne.s32.totalorder %s111, %s125
    %p127 = scmp.eq.s32.totalorder %s17, 0
    %p128 = por %p126, %p127
    %s129 = ssub.s32 %s11, %s18
    %p130 = scmp.eq.s32.totalorder %s129, 0
    %s132 = sadd.s32 %s131, 1
    %s133 = scalar_select %p130, %s131, %s132
    %p136 = pneg %p130
    %p137 = scmp.eq.s32.totalorder %s11, 1
    %p138 = por %p136, %p137
    %p139 = scmp.ne.s32.totalorder %s131, %s134
    %p140 = scmp.eq.s32.totalorder %s11, 0
    %p141 = por %p139, %p140
    %p142 = scmp.ne.s32.totalorder %s131, %s134
    %p143 = scmp.eq.s32.totalorder %s16, 1
    %p144 = por %p142, %p143
    %p145 = scmp.ne.s32.totalorder %s134, %s135
    %p146 = scmp.eq.s32.totalorder %s16, 0
    %p147 = por %p145, %p146
    %p148 = scmp.ne.s32.totalorder %s134, %s135
    %p149 = scmp.eq.s32.totalorder %s17, 1
    %p150 = por %p148, %p149
    %p152 = scmp.ne.s32.totalorder %s135, %s151
    %p153 = scmp.eq.s32.totalorder %s17, 0
    %p154 = por %p152, %p153
    %p155 = scmp.le.s32.totalorder 1, %s11
    %p156 = scmp.lt.s32.totalorder %s11, 3
    %p157 = pnand %p155, %p156
    %p158 = pneg %p157
    // Predicated region
    $region9: #{mlp_forward.1} parent=5 // pred_check
      _
    $region10: #{mlp_forward.1} parent=5 // pred_check_branch
      %160 = sbr.rel (%p157) target = $region12
    $region11: #{mlp_forward.1} parent=5 // pred_region
      %s161 = ssub.s32 %s11, 1
      // Predicated region
      $region13: #{mlp_forward.1} parent=11 // pred_check
        %p162 = pneg %p58
      $region14: #{mlp_forward.1} parent=11 // pred_check_branch
        %164 = sbr.rel (%p162) target = $region16
      $region15: #{mlp_forward.1} parent=11 // pred_region
        _
      $region16: #{mlp_forward.1} parent=11 // pred_fallthru
        _
      // Predicated region
      $region17: #{mlp_forward.1} parent=11 // pred_check
        %p165 = pneg %p79
      $region18: #{mlp_forward.1} parent=11 // pred_check_branch
        %167 = sbr.rel (%p165) target = $region20
      $region19: #{mlp_forward.1} parent=11 // pred_region
        _
      $region20: #{mlp_forward.1} parent=11 // pred_fallthru
        _
      // Predicated region
      $region21: #{mlp_forward.1} parent=11 // pred_check
        %p168 = pneg %p100
      $region22: #{mlp_forward.1} parent=11 // pred_check_branch
        %170 = sbr.rel (%p168) target = $region24
      $region23: #{mlp_forward.1} parent=11 // pred_region
        _
      $region24: #{mlp_forward.1} parent=11 // pred_fallthru
        _
      // Predicated region
      $region25: #{mlp_forward.1} parent=11 // pred_check
        %p171 = pneg %p121
      $region26: #{mlp_forward.1} parent=11 // pred_check_branch
        %173 = sbr.rel (%p171) target = $region28
      $region27: #{mlp_forward.1} parent=11 // pred_region
        _
      $region28: #{mlp_forward.1} parent=11 // pred_fallthru
        _
    $region12: #{mlp_forward.1} parent=5 // pred_fallthru
      _
    %p174 = scmp.lt.s32.totalorder %s11, 2
    // Predicated region
    $region29: #{mlp_forward.1} parent=5 // pred_check
      %p175 = pneg %p174
    $region30: #{mlp_forward.1} parent=5 // pred_check_branch
      %177 = sbr.rel (%p175) target = $region32
    $region31: #{mlp_forward.1} parent=5 // pred_region
      // Predicated region
      $region33: #{mlp_forward.1} parent=31 // pred_check
        %p178 = pneg %p31
      $region34: #{mlp_forward.1} parent=31 // pred_check_branch
        %180 = sbr.rel (%p178) target = $region36
      $region35: #{mlp_forward.1} parent=31 // pred_region
        %s181 = smul.u32 16, %s11
        %p182 = scmp.lt.s32.totalorder %s181, 31
        %s183 = scalar_select %p182, %s181, 31
        %s184 = smul.addr %s183, 8
        %s185 = scalar_lea.vmem %s0, %s184
        %s186 = smul.u32 16, %s11
      $region36: #{mlp_forward.1} parent=31 // pred_fallthru
        _
    $region32: #{mlp_forward.1} parent=5 // pred_fallthru
      _
    %p187 = scmp.le.s32.totalorder 1, %s11
    %p188 = scmp.lt.s32.totalorder %s11, 3
    %p189 = pnand %p187, %p188
    %p190 = pneg %p189
    // Predicated region
    $region37: #{mlp_forward.1} parent=5 // pred_check
      _
    $region38: #{mlp_forward.1} parent=5 // pred_check_branch
      %192 = sbr.rel (%p189) target = $region40
    $region39: #{mlp_forward.1} parent=5 // pred_region
      %s193 = ssub.s32 %s11, 1
      %s194 = smul.u32 16, %s16
      %p195 = scmp.lt.s32.totalorder %s194, 31
      %s196 = scalar_select %p195, %s194, 31
      %s197 = smul.addr %s196, 8
      %s198 = scalar_lea.vmem %s0, %s197
      %p199 = pneg %p37
      %p200 = pneg %p34
      %p201 = pneg %p58
      %p202 = pneg %p55
      %p203 = pneg %p79
      %p204 = pneg %p76
      %p205 = pneg %p100
      %p206 = pneg %p97
      %p207 = pneg %p121
      %p208 = pneg %p118
      %p209 = pneg %p147
      %p210 = pneg %p144
      %s211 = smul.u32 16, %s16
      %p212 = scmp.lt.s32.totalorder %s211, 31
      %s213 = scalar_select %p212, %s211, 31
      %s214 = smul.addr %s213, 8
      %s215 = scalar_lea.vmem %s5, %s214
      %s216 = smul.u32 16, %s16
      %p217 = scmp.lt.s32.totalorder %s216, 31
      %s218 = scalar_select %p217, %s216, 31
      %s219 = smul.addr %s218, 8
      %s220 = scalar_lea.vmem %s0, %s219
      %s221 = smul.u32 16, %s16
      %s222 = smul.u32 16, %s16
      %p223 = scmp.lt.s32.totalorder %s222, 31
      %s224 = scalar_select %p223, %s222, 31
      %s225 = smul.addr %s224, 8
      %s226 = scalar_lea.vmem %s5, %s225
      %s227 = smul.u32 16, %s16
      %v228 = vld [vmem:[%s220] sm:$0xff]
      %v229 = vld [vmem:[%s220 + $0x8] sm:$0xff]
      %v230 = vld [vmem:[%s220 + $0x10] sm:$0xff]
      %v231 = vld [vmem:[%s220 + $0x18] sm:$0xff]
      %v232 = vld [vmem:[%s220 + $0x20] sm:$0xff]
      %v233 = vld [vmem:[%s220 + $0x28] sm:$0xff]
      %v234 = vld [vmem:[%s220 + $0x30] sm:$0xff]
      %v235 = vld [vmem:[%s220 + $0x38] sm:$0xff]
      %v236 = vld [vmem:[%s220 + $0x40] sm:$0xff]
      %v237 = vld [vmem:[%s220 + $0x48] sm:$0xff]
      %v238 = vld [vmem:[%s220 + $0x50] sm:$0xff]
      %v239 = vld [vmem:[%s220 + $0x58] sm:$0xff]
      %v240 = vld [vmem:[%s220 + $0x60] sm:$0xff]
      %v241 = vld [vmem:[%s220 + $0x68] sm:$0xff]
      %v242 = vld [vmem:[%s220 + $0x70] sm:$0xff]
      %v243 = vld [vmem:[%s220 + $0x78] sm:$0xff]
      %v244 = vld [vmem:[%s1] sm:$0xff]
      %v245 = vld [vmem:[%s1 + $0x8] sm:$0xff]
      %v246 = vld [vmem:[%s1 + $0x10] sm:$0xff]
      %v247 = vld [vmem:[%s1 + $0x18] sm:$0xff]
      %v248 = vld [vmem:[%s1 + $0x20] sm:$0xff]
      %v249 = vld [vmem:[%s1 + $0x28] sm:$0xff]
      %v250 = vld [vmem:[%s1 + $0x30] sm:$0xff]
      %v251 = vld [vmem:[%s1 + $0x38] sm:$0xff]
      %v252 = vld [vmem:[%s1 + $0x40] sm:$0xff]
      %v253 = vld [vmem:[%s1 + $0x48] sm:$0xff]
      %v254 = vld [vmem:[%s1 + $0x50] sm:$0xff]
      %v255 = vld [vmem:[%s1 + $0x58] sm:$0xff]
      %v256 = vld [vmem:[%s1 + $0x60] sm:$0xff]
      %v257 = vld [vmem:[%s1 + $0x68] sm:$0xff]
      %v258 = vld [vmem:[%s1 + $0x70] sm:$0xff]
      %v259 = vld [vmem:[%s1 + $0x78] sm:$0xff]
      %v260 = vld [vmem:[%s2] sm:$0x1]
      %v262 = vlaneseq
      %v263 = vshrl.u32 %v262, 7
      %v264 = vsub.s32 0, %v263
      %v265 = vrot.slane %v260, %v264
      %267 = vmatprep.subr.mxu0 0.0
      %268 = vmatpush1.msra.mxu0 %v259
      %269 = vmatprep.subr.mxu0 0.0
      %270 = vmatpush1.msra.mxu0 %v258
      %271 = vmatprep.subr.mxu0 0.0
      %272 = vmatpush1.msra.mxu0 %v257
      %273 = vmatprep.subr.mxu0 0.0
      %274 = vmatpush1.msra.mxu0 %v256
      %275 = vmatprep.subr.mxu0 0.0
      %276 = vmatpush1.msra.mxu0 %v255
      %277 = vmatprep.subr.mxu0 0.0
      %278 = vmatpush1.msra.mxu0 %v254
      %279 = vmatprep.subr.mxu0 0.0
      %280 = vmatpush1.msra.mxu0 %v253
      %281 = vmatprep.subr.mxu0 0.0
      %282 = vmatpush1.msra.mxu0 %v252
      %283 = vmatprep.subr.mxu0 0.0
      %284 = vmatpush1.msra.mxu0 %v251
      %285 = vmatprep.subr.mxu0 0.0
      %286 = vmatpush1.msra.mxu0 %v250
      %287 = vmatprep.subr.mxu0 0.0
      %288 = vmatpush1.msra.mxu0 %v249
      %289 = vmatprep.subr.mxu0 0.0
      %290 = vmatpush1.msra.mxu0 %v248
      %291 = vmatprep.subr.mxu0 0.0
      %292 = vmatpush1.msra.mxu0 %v247
      %293 = vmatprep.subr.mxu0 0.0
      %294 = vmatpush1.msra.mxu0 %v246
      %295 = vmatprep.subr.mxu0 0.0
      %296 = vmatpush1.msra.mxu0 %v245
      %297 = vmatprep.subr.mxu0 0.0
      %298 = vmatpush1.msra.mxu0 %v244
      %299 = vmatprep.subr.mxu0 0.0
      %300 = vmatpush2.msra.mxu0 0.0
      %301 = vmatprep.subr.mxu0 0.0
      %302 = vmatpush2.msra.mxu0 0.0
      %303 = vmatprep.subr.mxu0 0.0
      %304 = vmatpush2.msra.mxu0 0.0
      %305 = vmatprep.subr.mxu0 0.0
      %306 = vmatpush2.msra.mxu0 0.0
      %307 = vmatprep.subr.mxu0 0.0
      %308 = vmatpush2.msra.mxu0 0.0
      %309 = vmatprep.subr.mxu0 0.0
      %310 = vmatpush2.msra.mxu0 0.0
      %311 = vmatprep.subr.mxu0 0.0
      %312 = vmatpush2.msra.mxu0 0.0
      %313 = vmatprep.subr.mxu0 0.0
      %314 = vmatpush2.msra.mxu0 0.0
      %315 = vmatprep.subr.mxu0 0.0
      %316 = vmatpush2.msra.mxu0 0.0
      %317 = vmatprep.subr.mxu0 0.0
      %318 = vmatpush2.msra.mxu0 0.0
      %319 = vmatprep.subr.mxu0 0.0
      %320 = vmatpush2.msra.mxu0 0.0
      %321 = vmatprep.subr.mxu0 0.0
      %322 = vmatpush2.msra.mxu0 0.0
      %323 = vmatprep.subr.mxu0 0.0
      %324 = vmatpush2.msra.mxu0 0.0
      %325 = vmatprep.subr.mxu0 0.0
      %326 = vmatpush2.msra.mxu0 0.0
      %327 = vmatprep.subr.mxu0 0.0
      %328 = vmatpush2.msra.mxu0 0.0
      %329 = vmatprep.subr.mxu0 0.0
      %330 = vmatpush2.msra.mxu0 0.0
      %331 = vmatprep.mubr.f32.mxu0 0.0
      %332 = vmatmul.mubr.f32.gmra.mxu0 %v228
      %v333 = vpop.f32.mrf.mxu0
      %v334 = vadd.f32 %v265, %v333
      %v335 = vpop.f32.mrf.mxu0
      %336 = vmatprep.mubr.f32.mxu0 0.0
      %337 = vmatmul.mubr.f32.gmra.mxu0 %v229
      %v338 = vpop.f32.mrf.mxu0
      %v339 = vadd.f32 %v265, %v338
      %v340 = vpop.f32.mrf.mxu0
      %341 = vmatprep.mubr.f32.mxu0 0.0
      %342 = vmatmul.mubr.f32.gmra.mxu0 %v230
      %v343 = vpop.f32.mrf.mxu0
      %v344 = vadd.f32 %v265, %v343
      %v345 = vpop.f32.mrf.mxu0
      %346 = vmatprep.mubr.f32.mxu0 0.0
      %347 = vmatmul.mubr.f32.gmra.mxu0 %v231
      %v348 = vpop.f32.mrf.mxu0
      %v349 = vadd.f32 %v265, %v348
      %v350 = vpop.f32.mrf.mxu0
      %351 = vmatprep.mubr.f32.mxu0 0.0
      %352 = vmatmul.mubr.f32.gmra.mxu0 %v232
      %v353 = vpop.f32.mrf.mxu0
      %v354 = vadd.f32 %v265, %v353
      %v355 = vpop.f32.mrf.mxu0
      %356 = vmatprep.mubr.f32.mxu0 0.0
      %357 = vmatmul.mubr.f32.gmra.mxu0 %v233
      %v358 = vpop.f32.mrf.mxu0
      %v359 = vadd.f32 %v265, %v358
      %v360 = vpop.f32.mrf.mxu0
      %361 = vmatprep.mubr.f32.mxu0 0.0
      %362 = vmatmul.mubr.f32.gmra.mxu0 %v234
      %v363 = vpop.f32.mrf.mxu0
      %v364 = vadd.f32 %v265, %v363
      %v365 = vpop.f32.mrf.mxu0
      %366 = vmatprep.mubr.f32.mxu0 0.0
      %367 = vmatmul.mubr.f32.gmra.mxu0 %v235
      %v368 = vpop.f32.mrf.mxu0
      %v369 = vadd.f32 %v265, %v368
      %v370 = vpop.f32.mrf.mxu0
      %371 = vmatprep.mubr.f32.mxu0 0.0
      %372 = vmatmul.mubr.f32.gmra.mxu0 %v236
      %v373 = vpop.f32.mrf.mxu0
      %v374 = vadd.f32 %v265, %v373
      %v375 = vpop.f32.mrf.mxu0
      %376 = vmatprep.mubr.f32.mxu0 0.0
      %377 = vmatmul.mubr.f32.gmra.mxu0 %v237
      %v378 = vpop.f32.mrf.mxu0
      %v379 = vadd.f32 %v265, %v378
      %v380 = vpop.f32.mrf.mxu0
      %381 = vmatprep.mubr.f32.mxu0 0.0
      %382 = vmatmul.mubr.f32.gmra.mxu0 %v238
      %v383 = vpop.f32.mrf.mxu0
      %v384 = vadd.f32 %v265, %v383
      %v385 = vpop.f32.mrf.mxu0
      %386 = vmatprep.mubr.f32.mxu0 0.0
      %387 = vmatmul.mubr.f32.gmra.mxu0 %v239
      %v388 = vpop.f32.mrf.mxu0
      %v389 = vadd.f32 %v265, %v388
      %v390 = vpop.f32.mrf.mxu0
      %391 = vmatprep.mubr.f32.mxu0 0.0
      %392 = vmatmul.mubr.f32.gmra.mxu0 %v240
      %v393 = vpop.f32.mrf.mxu0
      %v394 = vadd.f32 %v265, %v393
      %v395 = vpop.f32.mrf.mxu0
      %396 = vmatprep.mubr.f32.mxu0 0.0
      %397 = vmatmul.mubr.f32.gmra.mxu0 %v241
      %v398 = vpop.f32.mrf.mxu0
      %v399 = vadd.f32 %v265, %v398
      %v400 = vpop.f32.mrf.mxu0
      %401 = vmatprep.mubr.f32.mxu0 0.0
      %402 = vmatmul.mubr.f32.gmra.mxu0 %v242
      %v403 = vpop.f32.mrf.mxu0
      %v404 = vadd.f32 %v265, %v403
      %v405 = vpop.f32.mrf.mxu0
      %406 = vmatprep.mubr.f32.mxu0 0.0
      %407 = vmatmul.mubr.f32.gmra.mxu0 %v243
      %v408 = vpop.f32.mrf.mxu0
      %v409 = vadd.f32 %v265, %v408
      %v410 = vpop.f32.mrf.mxu0
      %411 = vdwg.mxu0
      %v412 = vmax.f32 %v334, 0.0
      %v413 = vmax.f32 %v339, 0.0
      %v414 = vmax.f32 %v344, 0.0
      %v415 = vmax.f32 %v349, 0.0
      %v416 = vmax.f32 %v354, 0.0
      %v417 = vmax.f32 %v359, 0.0
      %v418 = vmax.f32 %v364, 0.0
      %v419 = vmax.f32 %v369, 0.0
      %v420 = vmax.f32 %v374, 0.0
      %v421 = vmax.f32 %v379, 0.0
      %v422 = vmax.f32 %v384, 0.0
      %v423 = vmax.f32 %v389, 0.0
      %v424 = vmax.f32 %v394, 0.0
      %v425 = vmax.f32 %v399, 0.0
      %v426 = vmax.f32 %v404, 0.0
      %v427 = vmax.f32 %v409, 0.0
      %v428 = vld [vmem:[%s3] sm:$0xff]
      %v429 = vld [vmem:[%s3 + $0x8] sm:$0xff]
      %v430 = vld [vmem:[%s3 + $0x10] sm:$0xff]
      %v431 = vld [vmem:[%s3 + $0x18] sm:$0xff]
      %v432 = vld [vmem:[%s3 + $0x20] sm:$0xff]
      %v433 = vld [vmem:[%s3 + $0x28] sm:$0xff]
      %v434 = vld [vmem:[%s3 + $0x30] sm:$0xff]
      %v435 = vld [vmem:[%s3 + $0x38] sm:$0xff]
      %v436 = vld [vmem:[%s3 + $0x40] sm:$0xff]
      %v437 = vld [vmem:[%s3 + $0x48] sm:$0xff]
      %v438 = vld [vmem:[%s3 + $0x50] sm:$0xff]
      %v439 = vld [vmem:[%s3 + $0x58] sm:$0xff]
      %v440 = vld [vmem:[%s3 + $0x60] sm:$0xff]
      %v441 = vld [vmem:[%s3 + $0x68] sm:$0xff]
      %v442 = vld [vmem:[%s3 + $0x70] sm:$0xff]
      %v443 = vld [vmem:[%s3 + $0x78] sm:$0xff]
      %v444 = vld [vmem:[%s4] sm:$0x1]
      %v446 = vlaneseq
      %v447 = vshrl.u32 %v446, 7
      %v448 = vsub.s32 0, %v447
      %v449 = vrot.slane %v444, %v448
      %451 = vmatprep.subr.mxu0 0.0
      %452 = vmatpush1.msra.mxu0 %v443
      %453 = vmatprep.subr.mxu0 0.0
      %454 = vmatpush1.msra.mxu0 %v442
      %455 = vmatprep.subr.mxu0 0.0
      %456 = vmatpush1.msra.mxu0 %v441
      %457 = vmatprep.subr.mxu0 0.0
      %458 = vmatpush1.msra.mxu0 %v440
      %459 = vmatprep.subr.mxu0 0.0
      %460 = vmatpush1.msra.mxu0 %v439
      %461 = vmatprep.subr.mxu0 0.0
      %462 = vmatpush1.msra.mxu0 %v438
      %463 = vmatprep.subr.mxu0 0.0
      %464 = vmatpush1.msra.mxu0 %v437
      %465 = vmatprep.subr.mxu0 0.0
      %466 = vmatpush1.msra.mxu0 %v436
      %467 = vmatprep.subr.mxu0 0.0
      %468 = vmatpush1.msra.mxu0 %v435
      %469 = vmatprep.subr.mxu0 0.0
      %470 = vmatpush1.msra.mxu0 %v434
      %471 = vmatprep.subr.mxu0 0.0
      %472 = vmatpush1.msra.mxu0 %v433
      %473 = vmatprep.subr.mxu0 0.0
      %474 = vmatpush1.msra.mxu0 %v432
      %475 = vmatprep.subr.mxu0 0.0
      %476 = vmatpush1.msra.mxu0 %v431
      %477 = vmatprep.subr.mxu0 0.0
      %478 = vmatpush1.msra.mxu0 %v430
      %479 = vmatprep.subr.mxu0 0.0
      %480 = vmatpush1.msra.mxu0 %v429
      %481 = vmatprep.subr.mxu0 0.0
      %482 = vmatpush1.msra.mxu0 %v428
      %483 = vmatprep.subr.mxu0 0.0
      %484 = vmatpush2.msra.mxu0 0.0
      %485 = vmatprep.subr.mxu0 0.0
      %486 = vmatpush2.msra.mxu0 0.0
      %487 = vmatprep.subr.mxu0 0.0
      %488 = vmatpush2.msra.mxu0 0.0
      %489 = vmatprep.subr.mxu0 0.0
      %490 = vmatpush2.msra.mxu0 0.0
      %491 = vmatprep.subr.mxu0 0.0
      %492 = vmatpush2.msra.mxu0 0.0
      %493 = vmatprep.subr.mxu0 0.0
      %494 = vmatpush2.msra.mxu0 0.0
      %495 = vmatprep.subr.mxu0 0.0
      %496 = vmatpush2.msra.mxu0 0.0
      %497 = vmatprep.subr.mxu0 0.0
      %498 = vmatpush2.msra.mxu0 0.0
      %499 = vmatprep.subr.mxu0 0.0
      %500 = vmatpush2.msra.mxu0 0.0
      %501 = vmatprep.subr.mxu0 0.0
      %502 = vmatpush2.msra.mxu0 0.0
      %503 = vmatprep.subr.mxu0 0.0
      %504 = vmatpush2.msra.mxu0 0.0
      %505 = vmatprep.subr.mxu0 0.0
      %506 = vmatpush2.msra.mxu0 0.0
      %507 = vmatprep.subr.mxu0 0.0
      %508 = vmatpush2.msra.mxu0 0.0
      %509 = vmatprep.subr.mxu0 0.0
      %510 = vmatpush2.msra.mxu0 0.0
      %511 = vmatprep.subr.mxu0 0.0
      %512 = vmatpush2.msra.mxu0 0.0
      %513 = vmatprep.subr.mxu0 0.0
      %514 = vmatpush2.msra.mxu0 0.0
      %515 = vmatprep.mubr.f32.mxu0 0.0
      %516 = vmatmul.mubr.f32.gmra.mxu0 %v412
      %v517 = vpop.f32.mrf.mxu0
      %v518 = vadd.f32 %v449, %v517
      %v519 = vpop.f32.mrf.mxu0
      %520 = vmatprep.mubr.f32.mxu0 0.0
      %521 = vmatmul.mubr.f32.gmra.mxu0 %v413
      %v522 = vpop.f32.mrf.mxu0
      %v523 = vadd.f32 %v449, %v522
      %v524 = vpop.f32.mrf.mxu0
      %525 = vmatprep.mubr.f32.mxu0 0.0
      %526 = vmatmul.mubr.f32.gmra.mxu0 %v414
      %v527 = vpop.f32.mrf.mxu0
      %v528 = vadd.f32 %v449, %v527
      %v529 = vpop.f32.mrf.mxu0
      %530 = vmatprep.mubr.f32.mxu0 0.0
      %531 = vmatmul.mubr.f32.gmra.mxu0 %v415
      %v532 = vpop.f32.mrf.mxu0
      %v533 = vadd.f32 %v449, %v532
      %v534 = vpop.f32.mrf.mxu0
      %535 = vmatprep.mubr.f32.mxu0 0.0
      %536 = vmatmul.mubr.f32.gmra.mxu0 %v416
      %v537 = vpop.f32.mrf.mxu0
      %v538 = vadd.f32 %v449, %v537
      %v539 = vpop.f32.mrf.mxu0
      %540 = vmatprep.mubr.f32.mxu0 0.0
      %541 = vmatmul.mubr.f32.gmra.mxu0 %v417
      %v542 = vpop.f32.mrf.mxu0
      %v543 = vadd.f32 %v449, %v542
      %v544 = vpop.f32.mrf.mxu0
      %545 = vmatprep.mubr.f32.mxu0 0.0
      %546 = vmatmul.mubr.f32.gmra.mxu0 %v418
      %v547 = vpop.f32.mrf.mxu0
      %v548 = vadd.f32 %v449, %v547
      %v549 = vpop.f32.mrf.mxu0
      %550 = vmatprep.mubr.f32.mxu0 0.0
      %551 = vmatmul.mubr.f32.gmra.mxu0 %v419
      %v552 = vpop.f32.mrf.mxu0
      %v553 = vadd.f32 %v449, %v552
      %v554 = vpop.f32.mrf.mxu0
      %555 = vmatprep.mubr.f32.mxu0 0.0
      %556 = vmatmul.mubr.f32.gmra.mxu0 %v420
      %v557 = vpop.f32.mrf.mxu0
      %v558 = vadd.f32 %v449, %v557
      %v559 = vpop.f32.mrf.mxu0
      %560 = vmatprep.mubr.f32.mxu0 0.0
      %561 = vmatmul.mubr.f32.gmra.mxu0 %v421
      %v562 = vpop.f32.mrf.mxu0
      %v563 = vadd.f32 %v449, %v562
      %v564 = vpop.f32.mrf.mxu0
      %565 = vmatprep.mubr.f32.mxu0 0.0
      %566 = vmatmul.mubr.f32.gmra.mxu0 %v422
      %v567 = vpop.f32.mrf.mxu0
      %v568 = vadd.f32 %v449, %v567
      %v569 = vpop.f32.mrf.mxu0
      %570 = vmatprep.mubr.f32.mxu0 0.0
      %571 = vmatmul.mubr.f32.gmra.mxu0 %v423
      %v572 = vpop.f32.mrf.mxu0
      %v573 = vadd.f32 %v449, %v572
      %v574 = vpop.f32.mrf.mxu0
      %575 = vmatprep.mubr.f32.mxu0 0.0
      %576 = vmatmul.mubr.f32.gmra.mxu0 %v424
      %v577 = vpop.f32.mrf.mxu0
      %v578 = vadd.f32 %v449, %v577
      %v579 = vpop.f32.mrf.mxu0
      %580 = vmatprep.mubr.f32.mxu0 0.0
      %581 = vmatmul.mubr.f32.gmra.mxu0 %v425
      %v582 = vpop.f32.mrf.mxu0
      %v583 = vadd.f32 %v449, %v582
      %v584 = vpop.f32.mrf.mxu0
      %585 = vmatprep.mubr.f32.mxu0 0.0
      %586 = vmatmul.mubr.f32.gmra.mxu0 %v426
      %v587 = vpop.f32.mrf.mxu0
      %v588 = vadd.f32 %v449, %v587
      %v589 = vpop.f32.mrf.mxu0
      %590 = vmatprep.mubr.f32.mxu0 0.0
      %591 = vmatmul.mubr.f32.gmra.mxu0 %v427
      %v592 = vpop.f32.mrf.mxu0
      %v593 = vadd.f32 %v449, %v592
      %v594 = vpop.f32.mrf.mxu0
      %595 = vdwg.mxu0
      %v596 = vxor.u32 %v518, 2147483648
      %v597 = vxor.u32 %v523, 2147483648
      %v598 = vxor.u32 %v528, 2147483648
      %v599 = vxor.u32 %v533, 2147483648
      %v600 = vxor.u32 %v538, 2147483648
      %v601 = vxor.u32 %v543, 2147483648
      %v602 = vxor.u32 %v548, 2147483648
      %v603 = vxor.u32 %v553, 2147483648
      %v604 = vxor.u32 %v558, 2147483648
      %v605 = vxor.u32 %v563, 2147483648
      %v606 = vxor.u32 %v568, 2147483648
      %v607 = vxor.u32 %v573, 2147483648
      %v608 = vxor.u32 %v578, 2147483648
      %v609 = vxor.u32 %v583, 2147483648
      %v610 = vxor.u32 %v588, 2147483648
      %v611 = vxor.u32 %v593, 2147483648
      %v612 = vmul.f32 %v596, 1.442695
      %v613 = vpow.pop %v612
      %v614 = vmul.f32 %v597, 1.442695
      %v615 = vpow.pop %v614
      %v616 = vmul.f32 %v598, 1.442695
      %v617 = vpow.pop %v616
      %v618 = vmul.f32 %v599, 1.442695
      %v619 = vpow.pop %v618
      %v620 = vmul.f32 %v600, 1.442695
      %v621 = vpow.pop %v620
      %v622 = vmul.f32 %v601, 1.442695
      %v623 = vpow.pop %v622
      %v624 = vmul.f32 %v602, 1.442695
      %v625 = vpow.pop %v624
      %v626 = vmul.f32 %v603, 1.442695
      %v627 = vpow.pop %v626
      %v628 = vmul.f32 %v604, 1.442695
      %v629 = vpow.pop %v628
      %v630 = vmul.f32 %v605, 1.442695
      %v631 = vpow.pop %v630
      %v632 = vmul.f32 %v606, 1.442695
      %v633 = vpow.pop %v632
      %v634 = vmul.f32 %v607, 1.442695
      %v635 = vpow.pop %v634
      %v636 = vmul.f32 %v608, 1.442695
      %v637 = vpow.pop %v636
      %v638 = vmul.f32 %v609, 1.442695
      %v639 = vpow.pop %v638
      %v640 = vmul.f32 %v610, 1.442695
      %v641 = vpow.pop %v640
      %v642 = vmul.f32 %v611, 1.442695
      %v643 = vpow.pop %v642
      %v644 = vadd.f32 %v613, 1.0
      %v645 = vadd.f32 %v615, 1.0
      %v646 = vadd.f32 %v617, 1.0
      %v647 = vadd.f32 %v619, 1.0
      %v648 = vadd.f32 %v621, 1.0
      %v649 = vadd.f32 %v623, 1.0
      %v650 = vadd.f32 %v625, 1.0
      %v651 = vadd.f32 %v627, 1.0
      %v652 = vadd.f32 %v629, 1.0
      %v653 = vadd.f32 %v631, 1.0
      %v654 = vadd.f32 %v633, 1.0
      %v655 = vadd.f32 %v635, 1.0
      %v656 = vadd.f32 %v637, 1.0
      %v657 = vadd.f32 %v639, 1.0
      %v658 = vadd.f32 %v641, 1.0
      %v659 = vadd.f32 %v643, 1.0
      %v660 = vrcp.pop %v644
      %v661 = vmul.f32 1.0, %v660
      %v662 = vrcp.pop %v645
      %v663 = vmul.f32 1.0, %v662
      %v664 = vrcp.pop %v646
      %v665 = vmul.f32 1.0, %v664
      %v666 = vrcp.pop %v647
      %v667 = vmul.f32 1.0, %v666
      %v668 = vrcp.pop %v648
      %v669 = vmul.f32 1.0, %v668
      %v670 = vrcp.pop %v649
      %v671 = vmul.f32 1.0, %v670
      %v672 = vrcp.pop %v650
      %v673 = vmul.f32 1.0, %v672
      %v674 = vrcp.pop %v651
      %v675 = vmul.f32 1.0, %v674
      %v676 = vrcp.pop %v652
      %v677 = vmul.f32 1.0, %v676
      %v678 = vrcp.pop %v653
      %v679 = vmul.f32 1.0, %v678
      %v680 = vrcp.pop %v654
      %v681 = vmul.f32 1.0, %v680
      %v682 = vrcp.pop %v655
      %v683 = vmul.f32 1.0, %v682
      %v684 = vrcp.pop %v656
      %v685 = vmul.f32 1.0, %v684
      %v686 = vrcp.pop %v657
      %v687 = vmul.f32 1.0, %v686
      %v688 = vrcp.pop %v658
      %v689 = vmul.f32 1.0, %v688
      %v690 = vrcp.pop %v659
      %v691 = vmul.f32 1.0, %v690
      %692 = vst [vmem:[%s226] sm:$0xff] %v661
      %693 = vst [vmem:[%s226 + $0x8] sm:$0xff] %v663
      %694 = vst [vmem:[%s226 + $0x10] sm:$0xff] %v665
      %695 = vst [vmem:[%s226 + $0x18] sm:$0xff] %v667
      %696 = vst [vmem:[%s226 + $0x20] sm:$0xff] %v669
      %697 = vst [vmem:[%s226 + $0x28] sm:$0xff] %v671
      %698 = vst [vmem:[%s226 + $0x30] sm:$0xff] %v673
      %699 = vst [vmem:[%s226 + $0x38] sm:$0xff] %v675
      %700 = vst [vmem:[%s226 + $0x40] sm:$0xff] %v677
      %701 = vst [vmem:[%s226 + $0x48] sm:$0xff] %v679
      %702 = vst [vmem:[%s226 + $0x50] sm:$0xff] %v681
      %703 = vst [vmem:[%s226 + $0x58] sm:$0xff] %v683
      %704 = vst [vmem:[%s226 + $0x60] sm:$0xff] %v685
      %705 = vst [vmem:[%s226 + $0x68] sm:$0xff] %v687
      %706 = vst [vmem:[%s226 + $0x70] sm:$0xff] %v689
      %707 = vst [vmem:[%s226 + $0x78] sm:$0xff] %v691
      %s708 = smul.u32 16, %s16
      %p709 = scmp.lt.s32.totalorder %s708, 31
      %s710 = scalar_select %p709, %s708, 31
      %s711 = smul.addr %s710, 8
      %s712 = scalar_lea.vmem %s5, %s711
      // Predicated region
      $region41: #{mlp_forward.1} parent=39 // pred_check
        %p713 = pneg %p144
      $region42: #{mlp_forward.1} parent=39 // pred_check_branch
        %715 = sbr.rel (%p713) target = $region44
      $region43: #{mlp_forward.1} parent=39 // pred_region
        %s716 = smul.u32 16, %s16
      $region44: #{mlp_forward.1} parent=39 // pred_fallthru
        _
    $region40: #{mlp_forward.1} parent=5 // pred_fallthru
      _
    %p717 = scmp.le.s32.totalorder 2, %s11
    // Predicated region
    $region45: #{mlp_forward.1} parent=5 // pred_check
      %p718 = pneg %p717
    $region46: #{mlp_forward.1} parent=5 // pred_check_branch
      %720 = sbr.rel (%p718) target = $region48
    $region47: #{mlp_forward.1} parent=5 // pred_region
      %s721 = ssub.s32 %s11, 2
      // Predicated region
      $region49: #{mlp_forward.1} parent=47 // pred_check
        %p722 = pneg %p150
      $region50: #{mlp_forward.1} parent=47 // pred_check_branch
        %724 = sbr.rel (%p722) target = $region52
      $region51: #{mlp_forward.1} parent=47 // pred_region
        %s725 = smul.u32 16, %s17
        %p726 = scmp.lt.s32.totalorder %s725, 31
        %s727 = scalar_select %p726, %s725, 31
        %s728 = smul.addr %s727, 8
        %s729 = scalar_lea.vmem %s5, %s728
      $region52: #{mlp_forward.1} parent=47 // pred_fallthru
        _
    $region48: #{mlp_forward.1} parent=5 // pred_fallthru
      _
  $region6: #{mlp_forward.1} parent=0 // loop_footer
    %s15 = sadd.s32 1, %s11
  $region7: #{mlp_forward.1} parent=0 // loop_footer_branch
    %10 = sbr.rel target = $region3
  $region8: #{mlp_forward.1} parent=0 // loop_exit
    _

</llo_original>
